<compile_context>
chip_gen: v7x
topology: tpu7x:2x2x1
jax: 0.10.0
libtpu: 0.0.40
codegen_flags: <defaults>
</compile_context>

<pallas_src>
import jax
import jax.numpy as jnp
from jax.experimental import pallas as pl
from jax.experimental.pallas import tpu as pltpu


# --------------------------------------------------------------------------- #
# Kernel
# --------------------------------------------------------------------------- #
def _top1_loss_kernel(x_ref, o_ref, diag_ref):
    tm, n = x_ref.shape

    # ---- diagonal of this row stripe, sliced from the resident stripe ----- #
    if tm == n:
        dblk = x_ref[...].astype(jnp.float32)                       # (tm, tm)
    else:
        # Wrapper guarantees tm % 128 == 0 whenever tm != n.
        diag_start = pl.multiple_of(pl.program_id(0) * tm, 128)
        dblk = x_ref[:, pl.ds(diag_start, tm)].astype(jnp.float32)  # (tm, tm)

    rows = jax.lax.broadcasted_iota(jnp.int32, (tm, tm), 0)
    cols = jax.lax.broadcasted_iota(jnp.int32, (tm, tm), 1)
    diag_ref[...] = jnp.sum(jnp.where(rows == cols, dblk, 0.0),
                            axis=1, keepdims=True)                  # (tm, 1)

    # ---- fused compute + reduction over 8-row groups ---------------------- #
    # sigmoid(a) + sigmoid(b) = 1 + 0.5*(tanh(a/2) + tanh(b/2)); constants are
    # folded into the wrapper, so only tanh terms are accumulated here.
    def _group_terms(xg, dg):
        return jnp.tanh(0.5 * (xg - dg)) + jnp.tanh(0.5 * (xg * xg))

    n_groups, rem = divmod(tm, 8)

    def body(g, acc):
        r0 = pl.multiple_of(g * 8, 8)
        xg = x_ref[pl.ds(r0, 8), :].astype(jnp.float32)             # (8, N)
        dg = diag_ref[pl.ds(r0, 8), :]                              # (8, 1)
        return acc + _group_terms(xg, dg)

    acc = jax.lax.fori_loop(0, n_groups, body,
                            jnp.zeros((8, n), jnp.float32), unroll=True)

    # Cross-sublane reduce on the XLU (idle unit here) -> lane-dense (1, N).
    total = jnp.sum(acc, axis=0, keepdims=True)

    if rem:  # ragged tail rows (only possible in the single-block fallback)
        r0 = n_groups * 8
        xg = x_ref[pl.ds(r0, rem), :].astype(jnp.float32)
        dg = diag_ref[pl.ds(r0, rem), :]
        total = total + jnp.sum(_group_terms(xg, dg), axis=0, keepdims=True)

    o_ref[0] = total                                                # (1, N)


# --------------------------------------------------------------------------- #
# Wrapper
# --------------------------------------------------------------------------- #
def _vmem_capacity_bytes():
    try:
        cap = getattr(pltpu.get_tpu_info(), "vmem_capacity_bytes", None)
        if cap:
            return int(cap)
    except Exception:
        pass
    return 64 * 1024 * 1024  # conservative: v7x per-TensorCore VMEM


def _pick_block_rows(n, itemsize):
    """Largest 128-multiple row stripe dividing N that fits the VMEM budget,
    preferring even tile counts (>=4) so v7x's two TensorCores stay balanced."""
    if n % 128 != 0 or n <= 128:
        # TODO(synk): pad ragged N to a multiple of 128 and mask/subtract the
        # padded contribution instead of falling back to a single block.
        return n
    cap = _vmem_capacity_bytes()
    budget = min(12 * 1024 * 1024, cap // 6)   # per input stripe (2x buffered)
    candidates = [tm for tm in (512, 256, 128) if n % tm == 0 and tm < n]
    if not candidates:
        return n
    fitting = [tm for tm in candidates if tm * n * itemsize <= budget]
    pool = fitting if fitting else [candidates[-1]]
    balanced = [tm for tm in pool if (n // tm) % 2 == 0 and (n // tm) >= 4]
    if balanced:
        return balanced[0]
    even = [tm for tm in pool if (n // tm) % 2 == 0]
    return even[0] if even else pool[0]


def top1_loss(logit, block_rows=None):
    """logit: [N, N] float array -> scalar f32 loss (matches TOP1Loss.forward)."""
    n, m = logit.shape
    assert n == m, "TOP1Loss expects a square logit matrix"
    tm = block_rows if block_rows is not None else _pick_block_rows(n, logit.dtype.itemsize)
    assert n % tm == 0, "block_rows must divide N"
    assert tm == n or tm % 128 == 0, "multi-tile stripes must be 128-row multiples"
    num_tiles = n // tm

    cap = _vmem_capacity_bytes()
    vmem_limit = min(40 * 1024 * 1024, int(cap * 0.6))

    partials = pl.pallas_call(
        _top1_loss_kernel,
        grid=(num_tiles,),
        in_specs=[
            pl.BlockSpec((tm, n), lambda i: (i, 0)),      # full-width row stripe
        ],
        out_specs=pl.BlockSpec((1, 1, n), lambda i: (i, 0, 0)),
        out_shape=jax.ShapeDtypeStruct((num_tiles, 1, n), jnp.float32),
        scratch_shapes=[pltpu.VMEM((tm, 1), jnp.float32)],   # stripe diagonal
        compiler_params=pltpu.CompilerParams(
            dimension_semantics=("parallel",),
            vmem_limit_bytes=vmem_limit,
        ),
    )(logit)

    # sigmoid(a)+sigmoid(b) = 1 + 0.5*(tanh terms); mean over the true N^2.
    return 1.0 + 0.5 * jnp.sum(partials) / jnp.float32(n * n)


def top1_loss_ref(logit):
    """Pure-JAX reference (mirrors the PyTorch module)."""
    logit = logit.astype(jnp.float32)
    diff = logit - jnp.diag(logit)[:, None]
    return jnp.mean(jax.nn.sigmoid(diff) + jax.nn.sigmoid(logit ** 2))


if __name__ == "__main__":
    key = jax.random.PRNGKey(0)

    # Small shape matching the module's typical use (batch of 8 items).
    n_small = 8
    logit_small = jax.random.normal(key, (n_small, n_small), dtype=jnp.float32)
    loss_small = jax.block_until_ready(top1_loss(logit_small))
    ref_small = jax.block_until_ready(top1_loss_ref(logit_small))
    assert jnp.allclose(loss_small, ref_small, atol=1e-5, rtol=1e-5), (loss_small, ref_small)

    # Larger case that exercises the tiled (grid > 1) pipelined path.
    n_big = 256
    logit_big = jax.random.normal(jax.random.PRNGKey(1), (n_big, n_big), dtype=jnp.float32)
    loss_big = jax.block_until_ready(top1_loss(logit_big, block_rows=128))
    ref_big = jax.block_until_ready(top1_loss_ref(logit_big))
    assert jnp.allclose(loss_big, ref_big, atol=1e-4, rtol=1e-5), (loss_big, ref_big)

    print("KERNEL_OK")
</pallas_src>

<mosaic_0001>
module attributes {stable_mosaic.version = 11 : i64} {
  func.func @_top1_loss_kernel(%arg0: i32, %arg1: memref<8x8xf32, #tpu.memory_space<vmem>>, %arg2: memref<1x1x8xf32, #tpu.memory_space<vmem>>, %arg3: memref<8x1xf32, #tpu.memory_space<vmem>>) attributes {dimension_semantics = [#tpu.dimension_semantics<parallel>], iteration_bounds = array<i64: 1>, scalar_prefetch = 0 : i64, scratch_operands = 1 : i64, tpu.core_type = #tpu.core_type<tc>, window_params = [{transform_indices = @transform_0, window_bounds = array<i64: 8, 8>}, {transform_indices = @transform_1, window_bounds = array<i64: 1, 1, 8>}]} {
    %c0 = arith.constant 0 : index
    %c0_0 = arith.constant 0 : index
    %0 = vector.load %arg1[%c0, %c0_0] : memref<8x8xf32, #tpu.memory_space<vmem>>, vector<8x8xf32>
    %1 = tpu.iota {dimensions = array<i32: 0>} : vector<8x8xi32>
    %2 = tpu.iota {dimensions = array<i32: 1>} : vector<8x8xi32>
    %3 = arith.cmpi eq, %1, %2 : vector<8x8xi32>
    %cst = arith.constant 0.000000e+00 : f32
    %4 = vector.broadcast %cst : f32 to vector<8x8xf32>
    %5 = arith.select %3, %0, %4 : vector<8x8xi1>, vector<8x8xf32>
    %cst_1 = arith.constant dense<0.000000e+00> : vector<8xf32>
    %6 = vector.multi_reduction <add>, %5, %cst_1 [1] : vector<8x8xf32> to vector<8xf32>
    %7 = vector.shape_cast %6 : vector<8xf32> to vector<8x1xf32>
    %c0_2 = arith.constant 0 : index
    %c0_3 = arith.constant 0 : index
    %8 = vector.load %arg3[%c0_2, %c0_3] : memref<8x1xf32, #tpu.memory_space<vmem>>, vector<8x1xf32>
    tpu.vector_store %arg3[%c0_2, %c0_3], %7 {strides = array<i32>} : memref<8x1xf32, #tpu.memory_space<vmem>>, vector<8x1xf32>,
    %cst_4 = arith.constant 0.000000e+00 : f32
    %9 = vector.broadcast %cst_4 : f32 to vector<8x8xf32>
    %c0_i32 = arith.constant 0 : i32
    %c8_i32 = arith.constant 8 : i32
    %10 = arith.muli %c0_i32, %c8_i32 : i32
    %11 = tpu.assume_multiple %10, 8 : i32
    %12 = arith.index_cast %11 : i32 to index
    %c0_5 = arith.constant 0 : index
    %13 = vector.load %arg1[%12, %c0_5] : memref<8x8xf32, #tpu.memory_space<vmem>>, vector<8x8xf32>
    %14 = arith.index_cast %11 : i32 to index
    %c0_6 = arith.constant 0 : index
    %15 = vector.load %arg3[%14, %c0_6] : memref<8x1xf32, #tpu.memory_space<vmem>>, vector<8x1xf32>
    %16 = vector.broadcast %15 : vector<8x1xf32> to vector<8x8xf32>
    %17 = arith.subf %13, %16 : vector<8x8xf32>
    %cst_7 = arith.constant 5.000000e-01 : f32
    %18 = vector.broadcast %cst_7 : f32 to vector<8x8xf32>
    %19 = arith.mulf %18, %17 : vector<8x8xf32>
    %20 = math.tanh %19 : vector<8x8xf32>
    %21 = arith.mulf %13, %13 : vector<8x8xf32>
    %cst_8 = arith.constant 5.000000e-01 : f32
    %22 = vector.broadcast %cst_8 : f32 to vector<8x8xf32>
    %23 = arith.mulf %22, %21 : vector<8x8xf32>
    %24 = math.tanh %23 : vector<8x8xf32>
    %25 = arith.addf %20, %24 : vector<8x8xf32>
    %26 = arith.addf %9, %25 : vector<8x8xf32>
    %c1_i32 = arith.constant 1 : i32
    %cst_9 = arith.constant dense<0.000000e+00> : vector<8xf32>
    %27 = vector.multi_reduction <add>, %26, %cst_9 [0] : vector<8x8xf32> to vector<8xf32>
    %28 = vector.shape_cast %27 : vector<8xf32> to vector<1x8xf32>
    %c0_10 = arith.constant 0 : index
    %c0_11 = arith.constant 0 : index
    %c0_12 = arith.constant 0 : index
    %29 = vector.load %arg2[%c0_10, %c0_11, %c0_12] : memref<1x1x8xf32, #tpu.memory_space<vmem>>, vector<1x1x8xf32>
    %30 = vector.shape_cast %29 : vector<1x1x8xf32> to vector<1x8xf32>
    %31 = vector.shape_cast %28 : vector<1x8xf32> to vector<1x1x8xf32>
    tpu.vector_store %arg2[%c0_10, %c0_11, %c0_12], %31 {strides = array<i32>} : memref<1x1x8xf32, #tpu.memory_space<vmem>>, vector<1x1x8xf32>,
    return
  }
  func.func @transform_0(%arg0: i32) -> (i32, i32) {
    %c0_i32 = arith.constant 0 : i32
    %c0_i32_0 = arith.constant 0 : i32
    return %arg0, %c0_i32 : i32, i32
  }
  func.func @transform_1(%arg0: i32) -> (i32, i32, i32) {
    %c0_i32 = arith.constant 0 : i32
    %c0_i32_0 = arith.constant 0 : i32
    %c0_i32_1 = arith.constant 0 : i32
    return %arg0, %c0_i32, %c0_i32_0 : i32, i32, i32
  }
}

</mosaic_0001>

<llo_original>
// kernel: tpu_custom_call.1
$region0: #{tpu_custom_call.1}
  #allocation0 [shape = 'u32[]', space=smem, size = 0x4, offset = 0x4, fixed_abs, tag = 'smem constant byte address 0x4 - core index']
  #allocation1 [shape = 'u32[144,128]{1,0:T(1,128)}', space=vmem, size = 0x12000, scoped, tag = 'internal scratch']
  #allocation2 [shape = 'f32[8,1]{1,0:T(8,128)}', space=vmem, size = 0x1000, scoped, tag = 'scratch operand']
  %s0 = inlined_call_operand.hbm [shape: f32[8,8], index: 0, kind: input, shape index: {}]
  %s1 = inlined_call_operand.hbm [shape: f32[1,1,8], index: 1, kind: output, shape index: {}]
  %s2 = sld [smem:[#allocation0]]
  $region18: #{tpu_custom_call.1} parent=0
    _
  %s4 = ssub.s32 1, %s2
  %s5 = scalar_select 0, %s4, %s2
  $region1: #{tpu_custom_call.1} parent=0
    #allocation3 [shape = 'u8[4096]{0}', space=vmem, size = 0x1000, scoped, tag = 'input window, operand 0, single buffered']
    #allocation4 [shape = 's32[1]{0}', space=sflag, size = 0x4, scoped, tag = 'scoped memory for tpu_custom_call.1']
    #allocation5 [shape = 's32[1]{0}', space=sflag, size = 0x4, scoped, tag = 'scoped memory for tpu_custom_call.1']
    #allocation6 [shape = 'u8[512]{0}', space=vmem, size = 0x400, scoped, tag = 'output window, operand 0, single buffered']
    %6 = vsyncpa [#allocation4], 0
    %7 = vsyncpa [#allocation5], 0
    // Predicated region
    $region2: #{tpu_custom_call.1} parent=1 // pred_check
      _
    $region3: #{tpu_custom_call.1} parent=1 // pred_check_branch
      %9 = sbr.rel (0) target = $region5
    $region4: #{tpu_custom_call.1} parent=1 // pred_region
      %s11 = ssub.s32 128, 128
      %12 = vsyncadd [#allocation4], %s11
      %s14 = sshll.u32 [#allocation3], 4
      %s15 = int_to_ptr.vmem [resolvable:$true] %s14
      %17 = dma.hbm_to_vmem [thread:$0]  %s0, 128, %s15, [#allocation4]
    $region5: #{tpu_custom_call.1} parent=1 // pred_fallthru
      _
    // Predicated region
    $region6: #{tpu_custom_call.1} parent=1 // pred_check
      _
    $region7: #{tpu_custom_call.1} parent=1 // pred_check_branch
      %19 = sbr.rel (0) target = $region9
    $region8: #{tpu_custom_call.1} parent=1 // pred_region
      %20 = dma.done [#allocation4], 128
    $region9: #{tpu_custom_call.1} parent=1 // pred_fallthru
      _
    %v21 = vld [vmem:[#allocation3] sm:$0xff]
    %v22 = vlaneseq
    %v23 = vshrl.u32 %v22, 7
    %v24 = vlaneseq
    %v25 = vand.u32 %v24, 127
    %vm26 = vcmp.eq.s32.totalorder %v23, %v25
    %v27 = vsel %vm26, %v21, 0.0
    %vm28 = vcmask 64512
    %v29 = vsel %vm28, %v27, 0.0
    %30 = vadd.xlane.f32.xlu0 %v29
    %v31 = vpop.xlane.xlu0 %30
    %vm32 = vcmask 7168
    %33 = vst.msk [vmem:[#allocation2] sm:$0xff] %vm32, %v31
    %v34 = vld [vmem:[#allocation3] sm:$0xff]
    %v35 = vld [vmem:[#allocation2] sm:$0xff]
    %37 = vset.pattern.permute.xlu0 0
    %38 = vperm.xlu0 %37, %v35
    %v39 = vpop.permute.xlu0 %38
    %v41 = vsub.f32 %v34, %v39
    %v42 = vmul.f32 %v41, 0.5
    %v43 = vtanh.pop %v42
    %v44 = vmul.f32 %v34, %v34
    %v45 = vmul.f32 %v44, 0.5
    %v46 = vtanh.pop %v45
    %v47 = vadd.f32 %v43, %v46
    %v48 = vadd.f32 %v47, 0.0
    %v49 = vsel %vm28, %v48, 0.0
    %v50 = vrot.slane %v49, 4
    %v51 = vadd.f32 %v49, %v50
    %v52 = vrot.slane %v51, 2
    %v53 = vadd.f32 %v51, %v52
    %v54 = vrot.slane %v53, 1
    %v55 = vadd.f32 %v53, %v54
    %vm56 = vcmask 57344
    %57 = vst.msk [vmem:[#allocation6] sm:$0x1] %vm56, %v55
    // Predicated region
    $region10: #{tpu_custom_call.1} parent=1 // pred_check
      _
    $region11: #{tpu_custom_call.1} parent=1 // pred_check_branch
      %59 = sbr.rel (0) target = $region13
    $region12: #{tpu_custom_call.1} parent=1 // pred_region
      %s61 = ssub.s32 16, 16
      %62 = vsyncadd [#allocation5], %s61
      %s64 = sshll.u32 [#allocation6], 4
      %s65 = int_to_ptr.vmem [resolvable:$true] %s64
      %67 = dma.vmem_to_hbm [thread:$0]  %s65, 16, %s1, [#allocation5]
    $region13: #{tpu_custom_call.1} parent=1 // pred_fallthru
      _
    // Predicated region
    $region14: #{tpu_custom_call.1} parent=1 // pred_check
      _
    $region15: #{tpu_custom_call.1} parent=1 // pred_check_branch
      %69 = sbr.rel (0) target = $region17
    $region16: #{tpu_custom_call.1} parent=1 // pred_region
      %70 = dma.done [#allocation5], 16
    $region17: #{tpu_custom_call.1} parent=1 // pred_fallthru
      _
    %71 = vsyncpa [#allocation4], 1
    %72 = vsyncpa [#allocation5], 1

</llo_original>
